<compile_context>
chip_gen: v7x
topology: tpu7x:2x2x1
jax: 0.10.0
libtpu: 0.0.40
codegen_flags: <defaults>
</compile_context>

<pallas_src>
import jax
import jax.numpy as jnp
from jax.experimental import pallas as pl
from jax.experimental.pallas import tpu as pltpu

_LANE = 128
_SUBLANE = 8

_VMEM_SPEC = pl.BlockSpec(memory_space=pltpu.MemorySpace.VMEM)


def _round_up(v, m):
    return ((v + m - 1) // m) * m


# ----------------------------- Pallas kernel --------------------------------

def make_fused_hypergnn_kernel(num_layers):
    """Fused: num_layers x relu(P @ (h W_i) + b_i) -> mean-pool -> classifier Linear.

    Refs: p (N,N), x (N,F), w_stack (L,F,F), b_stack (L,1,F), pool (G,N),
          wl (F,C), bl (1,C), out (G,C).  Everything whole-array resident in VMEM.
    MXU operands run in p.dtype (f32 or bf16); accumulation + epilogue stay f32."""

    def kernel(p_ref, x_ref, ws_ref, bs_ref, pool_ref, wl_ref, bl_ref, o_ref):
        cdt = p_ref.dtype                       # MXU compute dtype
        p = p_ref[...]                          # (N, N) static propagation matrix
        h = x_ref[...].astype(jnp.float32)      # (N, F_pad)
        for i in range(num_layers):             # static Python loop: unrolled at trace time
            w = ws_ref[i]                       # (F_pad, F_pad), static slice of the stack
            b = bs_ref[i]                       # (1, F_pad), f32
            xw = jnp.dot(h.astype(cdt), w, preferred_element_type=jnp.float32)   # MXU
            pv = jnp.dot(p, xw.astype(cdt), preferred_element_type=jnp.float32)  # MXU
            h = jnp.maximum(pv + b, 0.0)        # f32 bias + ReLU on the VPU
        pooled = jnp.dot(pool_ref[...], h.astype(cdt),
                         preferred_element_type=jnp.float32)                     # (G_pad, F_pad)
        # Lane-dense (G_pad, 128) store; padded classifier columns are zero.
        o_ref[...] = jnp.dot(pooled.astype(cdt), wl_ref[...],
                             preferred_element_type=jnp.float32) + bl_ref[...]

    return kernel


# ------------------------------ parameters ----------------------------------

def init_params(key, in_channels, hidden_channels, num_layers, num_class):
    params = {"layers": []}
    c_in = in_channels
    for _ in range(num_layers):
        key, kw = jax.random.split(key)
        scale = jnp.sqrt(6.0 / (c_in + hidden_channels))                 # glorot-uniform-like
        w = jax.random.uniform(kw, (c_in, hidden_channels), jnp.float32, -scale, scale)
        b = jnp.zeros((hidden_channels,), jnp.float32)
        params["layers"].append((w, b))
        c_in = hidden_channels
    key, kl = jax.random.split(key)
    scale = jnp.sqrt(6.0 / (hidden_channels + num_class))
    params["lin_w"] = jax.random.uniform(kl, (hidden_channels, num_class), jnp.float32, -scale, scale)
    params["lin_b"] = jnp.zeros((num_class,), jnp.float32)
    return params


# --------------------- static (once-per-graph) preprocessing -----------------

def build_static_operands(params, hyperedge_index, batch, num_nodes, num_edges,
                          num_graphs, *, compute_dtype=jnp.float32):
    """Everything that does NOT depend on x: done ONCE (get_hg equivalent + padding)."""
    n = num_nodes
    num_layers = len(params["layers"])
    in_channels = params["layers"][0][0].shape[0]
    hidden = params["layers"][0][0].shape[1]
    num_class = params["lin_w"].shape[1]

    feat_pad = max(_round_up(in_channels, _LANE), _round_up(hidden, _LANE))
    c_pad = _round_up(num_class, _LANE)
    g_pad = _round_up(max(num_graphs, 1), _SUBLANE)

    # Dense incidence H (add, so duplicate (node, edge) pairs match PyG's scatter-add
    # degree computation), then fold D^-1 and B^-1 into one propagation matrix P.
    H = jnp.zeros((n, num_edges), jnp.float32).at[
        hyperedge_index[0], hyperedge_index[1]].add(1.0)
    D = H.sum(axis=1)                        # node degree (edge weights = 1)
    B = H.sum(axis=0)                        # hyperedge cardinality
    invD = jnp.where(D > 0, 1.0 / D, 0.0)    # PyG: 1/D with inf -> 0
    invB = jnp.where(B > 0, 1.0 / B, 0.0)
    P = jnp.dot(invD[:, None] * H * invB[None, :], H.T)   # (N, N)

    # global_mean_pool as a (G_pad, N) averaging matrix (padded rows = 0)
    onehot = (batch[None, :] == jnp.arange(num_graphs)[:, None]).astype(jnp.float32)
    pool_mat = onehot / jnp.maximum(onehot.sum(axis=1, keepdims=True), 1.0)
    pool_pad = jnp.zeros((g_pad, n), jnp.float32).at[:num_graphs, :].set(pool_mat)

    # Stacked, lane-dense layer weights / biases (one ref for all layers).
    w_stack = jnp.zeros((num_layers, feat_pad, feat_pad), jnp.float32)
    b_stack = jnp.zeros((num_layers, 1, feat_pad), jnp.float32)
    for i, (w, b) in enumerate(params["layers"]):
        w_stack = w_stack.at[i, :w.shape[0], :w.shape[1]].set(w)
        b_stack = b_stack.at[i, 0, :b.shape[0]].set(b)

    # Classifier padded to a lane-dense (feat_pad, 128) slab.
    wl_pad = jnp.zeros((feat_pad, c_pad), jnp.float32).at[:hidden, :num_class].set(params["lin_w"])
    bl_pad = jnp.zeros((1, c_pad), jnp.float32).at[0, :num_class].set(params["lin_b"])

    static_ops = dict(
        P=P.astype(compute_dtype),
        pool=pool_pad.astype(compute_dtype),
        w_stack=w_stack.astype(compute_dtype),
        b_stack=b_stack,                       # f32 epilogue operand
        wl=wl_pad.astype(compute_dtype),
        bl=bl_pad,                             # f32 epilogue operand
    )
    meta = dict(num_layers=num_layers, feat_pad=feat_pad, c_pad=c_pad, g_pad=g_pad,
                num_graphs=num_graphs, num_class=num_class, compute_dtype=compute_dtype)
    return static_ops, meta


def _padded_vmem_bytes(*arrays):
    """Rough VMEM footprint (last dim -> 128 lanes, second-last -> 8 sublanes)."""
    total = 0
    for a in arrays:
        shape = list(a.shape) if a.ndim else [1]
        shape[-1] = _round_up(shape[-1], _LANE)
        if len(shape) >= 2:
            shape[-2] = _round_up(shape[-2], _SUBLANE)
        n = 1
        for d in shape:
            n *= d
        total += n * jnp.dtype(a.dtype).itemsize
    return total


# ------------------------------ fused forward --------------------------------

def make_forward_fn(static_ops, meta):
    num_graphs = meta["num_graphs"]
    num_class = meta["num_class"]
    g_pad, c_pad = meta["g_pad"], meta["c_pad"]
    feat_pad = meta["feat_pad"]
    cdt = meta["compute_dtype"]
    kernel = make_fused_hypergnn_kernel(meta["num_layers"])

    def forward(x):
        n, c_in = x.shape
        x_pad = jnp.zeros((n, feat_pad), cdt).at[:, :c_in].set(x.astype(cdt))
        all_ops = (static_ops["P"], x_pad, static_ops["w_stack"], static_ops["b_stack"],
                   static_ops["pool"], static_ops["wl"], static_ops["bl"])
        vmem_needed = _padded_vmem_bytes(*all_ops) + g_pad * c_pad * 4
        vmem_limit = int(min(max(2 * vmem_needed, 8 * 1024 * 1024), 64 * 1024 * 1024))
        out_pad = pl.pallas_call(
            kernel,
            out_shape=jax.ShapeDtypeStruct((g_pad, c_pad), jnp.float32),
            in_specs=[_VMEM_SPEC] * len(all_ops),
            out_specs=_VMEM_SPEC,
            compiler_params=pltpu.CompilerParams(vmem_limit_bytes=vmem_limit),
        )(*all_ops)
        # F.dropout(training=False) is the identity in eval mode (matched here).
        return out_pad[:num_graphs, :num_class]

    return jax.jit(forward)


# ---------------------------- pure-JAX reference -----------------------------

def _reference_forward(params, x, hyperedge_index, batch, num_edges, num_graphs):
    n = x.shape[0]
    H = jnp.zeros((n, num_edges), jnp.float32).at[
        hyperedge_index[0], hyperedge_index[1]].add(1.0)
    D = H.sum(axis=1)
    B = H.sum(axis=0)
    invD = jnp.where(D > 0, 1.0 / D, 0.0)
    invB = jnp.where(B > 0, 1.0 / B, 0.0)
    h = x
    for (w, bias) in params["layers"]:
        xw = h @ w
        he = H.T @ xw
        nv = H @ (invB[:, None] * he)
        h = jnp.maximum(invD[:, None] * nv + bias[None, :], 0.0)
    onehot = (batch[None, :] == jnp.arange(num_graphs)[:, None]).astype(jnp.float32)
    pooled = (onehot @ h) / jnp.maximum(onehot.sum(axis=1, keepdims=True), 1.0)
    return pooled @ params["lin_w"] + params["lin_b"][None, :]


# --------------------------------- main --------------------------------------

if __name__ == "__main__":
    # cfg-implied small shapes
    num_nodes = 16
    in_channels = 8          # dataset.num_node_features
    hidden_channels = 32     # model.hidden_channels
    num_layer = 2            # model.num_layer
    num_class = 4            # dataset.num_class
    num_edges = 6
    num_graphs = 2

    key = jax.random.PRNGKey(0)
    key, kx = jax.random.split(key)
    x = jax.random.normal(kx, (num_nodes, in_channels), jnp.float32)

    # Deterministic hypergraph: 6 hyperedges of 4 nodes each.
    edge_nodes = [[0, 1, 2, 3], [2, 3, 4, 5], [4, 5, 6, 7],
                  [8, 9, 10, 11], [10, 11, 12, 13], [12, 13, 14, 15]]
    rows, cols = [], []
    for e, nodes in enumerate(edge_nodes):
        for v in nodes:
            rows.append(v)
            cols.append(e)
    hyperedge_index = jnp.array([rows, cols], dtype=jnp.int32)

    # Two graphs: nodes 0..7 -> graph 0, nodes 8..15 -> graph 1.
    batch = jnp.array([0] * 8 + [1] * 8, dtype=jnp.int32)

    params = init_params(key, in_channels, hidden_channels, num_layer, num_class)
    ref = _reference_forward(params, x, hyperedge_index, batch, num_edges, num_graphs)

    # ---- f32 path (validated tightly against the reference) -----------------
    ops_f32, meta_f32 = build_static_operands(
        params, hyperedge_index, batch, num_nodes, num_edges, num_graphs,
        compute_dtype=jnp.float32)
    fwd_f32 = make_forward_fn(ops_f32, meta_f32)
    out = jax.block_until_ready(fwd_f32(x))
    assert out.shape == (num_graphs, num_class)
    assert jnp.allclose(out, ref, rtol=1e-4, atol=1e-4)

    # ---- bf16 MXU-operand path (f32 accumulation/epilogue), looser tolerance -
    ops_bf16, meta_bf16 = build_static_operands(
        params, hyperedge_index, batch, num_nodes, num_edges, num_graphs,
        compute_dtype=jnp.bfloat16)
    fwd_bf16 = make_forward_fn(ops_bf16, meta_bf16)
    out_bf16 = jax.block_until_ready(fwd_bf16(x))
    assert out_bf16.shape == (num_graphs, num_class)
    assert jnp.allclose(out_bf16, ref, rtol=5e-2, atol=5e-2)

    print("KERNEL_OK")
</pallas_src>

<mosaic_0001>
module attributes {stable_mosaic.version = 11 : i64} {
  func.func @kernel(%arg0: memref<16x16xf32, #tpu.memory_space<vmem>>, %arg1: memref<16x128xf32, #tpu.memory_space<vmem>>, %arg2: memref<2x128x128xf32, #tpu.memory_space<vmem>>, %arg3: memref<2x1x128xf32, #tpu.memory_space<vmem>>, %arg4: memref<8x16xf32, #tpu.memory_space<vmem>>, %arg5: memref<128x128xf32, #tpu.memory_space<vmem>>, %arg6: memref<1x128xf32, #tpu.memory_space<vmem>>, %arg7: memref<8x128xf32, #tpu.memory_space<vmem>>) attributes {dimension_semantics = [], scalar_prefetch = 0 : i64, scratch_operands = 0 : i64, tpu.core_type = #tpu.core_type<tc>} {
    %c0 = arith.constant 0 : index
    %c0_0 = arith.constant 0 : index
    %0 = vector.load %arg0[%c0, %c0_0] : memref<16x16xf32, #tpu.memory_space<vmem>>, vector<16x16xf32>
    %c0_1 = arith.constant 0 : index
    %c0_2 = arith.constant 0 : index
    %1 = vector.load %arg1[%c0_1, %c0_2] : memref<16x128xf32, #tpu.memory_space<vmem>>, vector<16x128xf32>
    %c0_3 = arith.constant 0 : index
    %c0_4 = arith.constant 0 : index
    %c0_5 = arith.constant 0 : index
    %2 = vector.load %arg2[%c0_3, %c0_4, %c0_5] : memref<2x128x128xf32, #tpu.memory_space<vmem>>, vector<1x128x128xf32>
    %3 = vector.shape_cast %2 : vector<1x128x128xf32> to vector<128x128xf32>
    %c0_6 = arith.constant 0 : index
    %c0_7 = arith.constant 0 : index
    %c0_8 = arith.constant 0 : index
    %4 = vector.load %arg3[%c0_6, %c0_7, %c0_8] : memref<2x1x128xf32, #tpu.memory_space<vmem>>, vector<1x1x128xf32>
    %5 = vector.shape_cast %4 : vector<1x1x128xf32> to vector<1x128xf32>
    %cst = arith.constant dense<0.000000e+00> : vector<16x128xf32>
    %6 = tpu.matmul %1, %3, %cst {dimension_numbers = #tpu.dot_dimension_numbers<[1], [0], [0], [1], [0, 0, 1, 1], [], []>} : vector<16x128xf32>, vector<128x128xf32>, vector<16x128xf32> -> vector<16x128xf32>
    %cst_9 = arith.constant dense<0.000000e+00> : vector<16x128xf32>
    %7 = tpu.matmul %0, %6, %cst_9 {dimension_numbers = #tpu.dot_dimension_numbers<[1], [0], [0], [1], [0, 0, 1, 1], [], []>} : vector<16x16xf32>, vector<16x128xf32>, vector<16x128xf32> -> vector<16x128xf32>
    %8 = vector.broadcast %5 : vector<1x128xf32> to vector<16x128xf32>
    %9 = arith.addf %7, %8 : vector<16x128xf32>
    %cst_10 = arith.constant 0.000000e+00 : f32
    %10 = vector.broadcast %cst_10 : f32 to vector<16x128xf32>
    %11 = arith.maximumf %9, %10 : vector<16x128xf32>
    %c1 = arith.constant 1 : index
    %c0_11 = arith.constant 0 : index
    %c0_12 = arith.constant 0 : index
    %12 = vector.load %arg2[%c1, %c0_11, %c0_12] : memref<2x128x128xf32, #tpu.memory_space<vmem>>, vector<1x128x128xf32>
    %13 = vector.shape_cast %12 : vector<1x128x128xf32> to vector<128x128xf32>
    %c1_13 = arith.constant 1 : index
    %c0_14 = arith.constant 0 : index
    %c0_15 = arith.constant 0 : index
    %14 = vector.load %arg3[%c1_13, %c0_14, %c0_15] : memref<2x1x128xf32, #tpu.memory_space<vmem>>, vector<1x1x128xf32>
    %15 = vector.shape_cast %14 : vector<1x1x128xf32> to vector<1x128xf32>
    %cst_16 = arith.constant dense<0.000000e+00> : vector<16x128xf32>
    %16 = tpu.matmul %11, %13, %cst_16 {dimension_numbers = #tpu.dot_dimension_numbers<[1], [0], [0], [1], [0, 0, 1, 1], [], []>} : vector<16x128xf32>, vector<128x128xf32>, vector<16x128xf32> -> vector<16x128xf32>
    %cst_17 = arith.constant dense<0.000000e+00> : vector<16x128xf32>
    %17 = tpu.matmul %0, %16, %cst_17 {dimension_numbers = #tpu.dot_dimension_numbers<[1], [0], [0], [1], [0, 0, 1, 1], [], []>} : vector<16x16xf32>, vector<16x128xf32>, vector<16x128xf32> -> vector<16x128xf32>
    %18 = vector.broadcast %15 : vector<1x128xf32> to vector<16x128xf32>
    %19 = arith.addf %17, %18 : vector<16x128xf32>
    %cst_18 = arith.constant 0.000000e+00 : f32
    %20 = vector.broadcast %cst_18 : f32 to vector<16x128xf32>
    %21 = arith.maximumf %19, %20 : vector<16x128xf32>
    %c0_19 = arith.constant 0 : index
    %c0_20 = arith.constant 0 : index
    %22 = vector.load %arg4[%c0_19, %c0_20] : memref<8x16xf32, #tpu.memory_space<vmem>>, vector<8x16xf32>
    %cst_21 = arith.constant dense<0.000000e+00> : vector<8x128xf32>
    %23 = tpu.matmul %22, %21, %cst_21 {dimension_numbers = #tpu.dot_dimension_numbers<[1], [0], [0], [1], [0, 0, 1, 1], [], []>} : vector<8x16xf32>, vector<16x128xf32>, vector<8x128xf32> -> vector<8x128xf32>
    %c0_22 = arith.constant 0 : index
    %c0_23 = arith.constant 0 : index
    %24 = vector.load %arg5[%c0_22, %c0_23] : memref<128x128xf32, #tpu.memory_space<vmem>>, vector<128x128xf32>
    %cst_24 = arith.constant dense<0.000000e+00> : vector<8x128xf32>
    %25 = tpu.matmul %23, %24, %cst_24 {dimension_numbers = #tpu.dot_dimension_numbers<[1], [0], [0], [1], [0, 0, 1, 1], [], []>} : vector<8x128xf32>, vector<128x128xf32>, vector<8x128xf32> -> vector<8x128xf32>
    %c0_25 = arith.constant 0 : index
    %c0_26 = arith.constant 0 : index
    %26 = vector.load %arg6[%c0_25, %c0_26] : memref<1x128xf32, #tpu.memory_space<vmem>>, vector<1x128xf32>
    %27 = vector.broadcast %26 : vector<1x128xf32> to vector<8x128xf32>
    %28 = arith.addf %25, %27 : vector<8x128xf32>
    %c0_27 = arith.constant 0 : index
    %c0_28 = arith.constant 0 : index
    %29 = vector.load %arg7[%c0_27, %c0_28] : memref<8x128xf32, #tpu.memory_space<vmem>>, vector<8x128xf32>
    tpu.vector_store %arg7[%c0_27, %c0_28], %28 {strides = array<i32>} : memref<8x128xf32, #tpu.memory_space<vmem>>, vector<8x128xf32>,
    return
  }
}

</mosaic_0001>

<llo_original>
// kernel: forward.1
$region0: #{forward.1}
  #allocation0 [shape = 'u32[]', space=smem, size = 0x4, offset = 0x4, fixed_abs, tag = 'smem constant byte address 0x4 - core index']
  #allocation1 [shape = 'u32[144,128]{1,0:T(1,128)}', space=vmem, size = 0x12000, scoped, tag = 'internal scratch']
  %s0 = inlined_call_operand.vmem [shape: f32[16,16], index: 0, kind: input, shape index: {}]
  %s1 = inlined_call_operand.vmem [shape: f32[16,128], index: 1, kind: input, shape index: {}]
  %s2 = inlined_call_operand.hbm [shape: f32[2,128,128], index: 2, kind: input, shape index: {}]
  %s3 = inlined_call_operand.vmem [shape: f32[2,1,128], index: 3, kind: input, shape index: {}]
  %s4 = inlined_call_operand.vmem [shape: f32[8,16], index: 4, kind: input, shape index: {}]
  %s5 = inlined_call_operand.hbm [shape: f32[128,128], index: 5, kind: input, shape index: {}]
  %s6 = inlined_call_operand.vmem [shape: f32[1,128], index: 6, kind: input, shape index: {}]
  %s7 = inlined_call_operand.vmem [shape: f32[8,128], index: 7, kind: output, shape index: {}]
  %s8 = sld [smem:[#allocation0]]
  $region46: #{forward.1} parent=0
    _
  %s10 = ssub.s32 1, %s8
  %s11 = scalar_select 0, %s10, %s8
  $region1: #{forward.1} parent=0
    #allocation2 [shape = 'u8[131072]{0}', space=vmem, size = 0x20000, scoped, tag = 'input window, operand 2, single buffered']
    #allocation3 [shape = 's32[1]{0}', space=sflag, size = 0x4, scoped, tag = 'scoped memory for forward.1']
    #allocation4 [shape = 'u8[65536]{0}', space=vmem, size = 0x10000, scoped, tag = 'input window, operand 5, single buffered']
    #allocation5 [shape = 's32[1]{0}', space=sflag, size = 0x4, scoped, tag = 'scoped memory for forward.1']
    %12 = vsyncpa [#allocation3], 0
    %13 = vsyncpa [#allocation5], 0
    // Predicated region
    $region2: #{forward.1} parent=1 // pred_check
      _
    $region3: #{forward.1} parent=1 // pred_check_branch
      %15 = sbr.rel (0) target = $region5
    $region4: #{forward.1} parent=1 // pred_region
      _
    $region5: #{forward.1} parent=1 // pred_fallthru
      _
    // Predicated region
    $region6: #{forward.1} parent=1 // pred_check
      _
    $region7: #{forward.1} parent=1 // pred_check_branch
      %17 = sbr.rel (0) target = $region9
    $region8: #{forward.1} parent=1 // pred_region
      _
    $region9: #{forward.1} parent=1 // pred_fallthru
      _
    // Predicated region
    $region10: #{forward.1} parent=1 // pred_check
      _
    $region11: #{forward.1} parent=1 // pred_check_branch
      %19 = sbr.rel (0) target = $region13
    $region12: #{forward.1} parent=1 // pred_region
      %s21 = ssub.s32 4096, 4096
      %22 = vsyncadd [#allocation3], %s21
      %s23 = sshll.u32 [#allocation2], 4
      %s24 = int_to_ptr.vmem [resolvable:$true] %s23
      %29 = dma.hbm_to_vmem [thread:$0]  %s2, 4096, %s24, [#allocation3], 128, 128, 8
    $region13: #{forward.1} parent=1 // pred_fallthru
      _
    // Predicated region
    $region14: #{forward.1} parent=1 // pred_check
      _
    $region15: #{forward.1} parent=1 // pred_check_branch
      %31 = sbr.rel (0) target = $region17
    $region16: #{forward.1} parent=1 // pred_region
      _
    $region17: #{forward.1} parent=1 // pred_fallthru
      _
    // Predicated region
    $region18: #{forward.1} parent=1 // pred_check
      _
    $region19: #{forward.1} parent=1 // pred_check_branch
      %33 = sbr.rel (0) target = $region21
    $region20: #{forward.1} parent=1 // pred_region
      _
    $region21: #{forward.1} parent=1 // pred_fallthru
      _
    // Predicated region
    $region22: #{forward.1} parent=1 // pred_check
      _
    $region23: #{forward.1} parent=1 // pred_check_branch
      %35 = sbr.rel (0) target = $region25
    $region24: #{forward.1} parent=1 // pred_region
      %s37 = ssub.s32 2048, 2048
      %38 = vsyncadd [#allocation5], %s37
      %s39 = sshll.u32 [#allocation4], 4
      %s40 = int_to_ptr.vmem [resolvable:$true] %s39
      %45 = dma.hbm_to_vmem [thread:$0]  %s5, 2048, %s40, [#allocation5], 128, 128, 8
    $region25: #{forward.1} parent=1 // pred_fallthru
      _
    // Predicated region
    $region26: #{forward.1} parent=1 // pred_check
      _
    $region27: #{forward.1} parent=1 // pred_check_branch
      %47 = sbr.rel (0) target = $region29
    $region28: #{forward.1} parent=1 // pred_region
      _
    $region29: #{forward.1} parent=1 // pred_fallthru
      _
    // Predicated region
    $region30: #{forward.1} parent=1 // pred_check
      _
    $region31: #{forward.1} parent=1 // pred_check_branch
      %49 = sbr.rel (0) target = $region33
    $region32: #{forward.1} parent=1 // pred_region
      %50 = dma.done [#allocation3], 4096
    $region33: #{forward.1} parent=1 // pred_fallthru
      _
    // Predicated region
    $region34: #{forward.1} parent=1 // pred_check
      _
    $region35: #{forward.1} parent=1 // pred_check_branch
      %52 = sbr.rel (0) target = $region37
    $region36: #{forward.1} parent=1 // pred_region
      %53 = dma.done [#allocation5], 2048
    $region37: #{forward.1} parent=1 // pred_fallthru
      _
    %v54 = vld [vmem:[%s0] sm:$0xff]
    %v55 = vld [vmem:[%s0 + $0x8] sm:$0xff]
    %v56 = vld [vmem:[%s1] sm:$0xff]
    %v57 = vld [vmem:[%s1 + $0x8] sm:$0xff]
    %v58 = vld [vmem:[#allocation2] sm:$0xff]
    %v59 = vld [vmem:[#allocation2 + $0x8] sm:$0xff]
    %v60 = vld [vmem:[#allocation2 + $0x10] sm:$0xff]
    %v61 = vld [vmem:[#allocation2 + $0x18] sm:$0xff]
    %v62 = vld [vmem:[#allocation2 + $0x20] sm:$0xff]
    %v63 = vld [vmem:[#allocation2 + $0x28] sm:$0xff]
    %v64 = vld [vmem:[#allocation2 + $0x30] sm:$0xff]
    %v65 = vld [vmem:[#allocation2 + $0x38] sm:$0xff]
    %v66 = vld [vmem:[#allocation2 + $0x40] sm:$0xff]
    %v67 = vld [vmem:[#allocation2 + $0x48] sm:$0xff]
    %v68 = vld [vmem:[#allocation2 + $0x50] sm:$0xff]
    %v69 = vld [vmem:[#allocation2 + $0x58] sm:$0xff]
    %v70 = vld [vmem:[#allocation2 + $0x60] sm:$0xff]
    %v71 = vld [vmem:[#allocation2 + $0x68] sm:$0xff]
    %v72 = vld [vmem:[#allocation2 + $0x70] sm:$0xff]
    %v73 = vld [vmem:[#allocation2 + $0x78] sm:$0xff]
    %v74 = vld [vmem:[%s3] sm:$0x1]
    %75 = vmatprep.subr.mxu0 0.0
    %76 = vmatpush1.msra.mxu0 %v58
    %77 = vmatprep.subr.mxu0 0.0
    %78 = vmatpush1.msra.mxu0 %v59
    %79 = vmatprep.subr.mxu0 0.0
    %80 = vmatpush1.msra.mxu0 %v60
    %81 = vmatprep.subr.mxu0 0.0
    %82 = vmatpush1.msra.mxu0 %v61
    %83 = vmatprep.subr.mxu0 0.0
    %84 = vmatpush1.msra.mxu0 %v62
    %85 = vmatprep.subr.mxu0 0.0
    %86 = vmatpush1.msra.mxu0 %v63
    %87 = vmatprep.subr.mxu0 0.0
    %88 = vmatpush1.msra.mxu0 %v64
    %89 = vmatprep.subr.mxu0 0.0
    %90 = vmatpush1.msra.mxu0 %v65
    %91 = vmatprep.subr.mxu0 0.0
    %92 = vmatpush1.msra.mxu0 %v66
    %93 = vmatprep.subr.mxu0 0.0
    %94 = vmatpush1.msra.mxu0 %v67
    %95 = vmatprep.subr.mxu0 0.0
    %96 = vmatpush1.msra.mxu0 %v68
    %97 = vmatprep.subr.mxu0 0.0
    %98 = vmatpush1.msra.mxu0 %v69
    %99 = vmatprep.subr.mxu0 0.0
    %100 = vmatpush1.msra.mxu0 %v70
    %101 = vmatprep.subr.mxu0 0.0
    %102 = vmatpush1.msra.mxu0 %v71
    %103 = vmatprep.subr.mxu0 0.0
    %104 = vmatpush1.msra.mxu0 %v72
    %105 = vmatprep.subr.mxu0 0.0
    %106 = vmatpush1.msra.mxu0 %v73
    %107 = vmatprep.subr.mxu0 0.0
    %108 = vmatpush1.msra.mxu0 0.0
    %109 = vmatprep.subr.mxu0 0.0
    %110 = vmatpush1.msra.mxu0 0.0
    %111 = vmatprep.subr.mxu0 0.0
    %112 = vmatpush1.msra.mxu0 0.0
    %113 = vmatprep.subr.mxu0 0.0
    %114 = vmatpush1.msra.mxu0 0.0
    %115 = vmatprep.subr.mxu0 0.0
    %116 = vmatpush1.msra.mxu0 0.0
    %117 = vmatprep.subr.mxu0 0.0
    %118 = vmatpush1.msra.mxu0 0.0
    %119 = vmatprep.subr.mxu0 0.0
    %120 = vmatpush1.msra.mxu0 0.0
    %121 = vmatprep.subr.mxu0 0.0
    %122 = vmatpush1.msra.mxu0 0.0
    %123 = vmatprep.subr.mxu0 0.0
    %124 = vmatpush1.msra.mxu0 0.0
    %125 = vmatprep.subr.mxu0 0.0
    %126 = vmatpush1.msra.mxu0 0.0
    %127 = vmatprep.subr.mxu0 0.0
    %128 = vmatpush1.msra.mxu0 0.0
    %129 = vmatprep.subr.mxu0 0.0
    %130 = vmatpush1.msra.mxu0 0.0
    %131 = vmatprep.subr.mxu0 0.0
    %132 = vmatpush1.msra.mxu0 0.0
    %133 = vmatprep.subr.mxu0 0.0
    %134 = vmatpush1.msra.mxu0 0.0
    %135 = vmatprep.subr.mxu0 0.0
    %136 = vmatpush1.msra.mxu0 0.0
    %137 = vmatprep.subr.mxu0 0.0
    %138 = vmatpush1.msra.mxu0 0.0
    %139 = vmatprep.mubr.f32.mxu0 0.0
    %140 = vmatmul.mubr.f32.gmra.mrb[0].mxu0 %v56
    %v141 = vpop.f32.mrb[0].mxu0
    %v142 = vadd.f32 0.0, %v141
    %v143 = vpop.f32.mrb[0].mxu0
    %144 = vmatprep.mubr.f32.mxu0 0.0
    %145 = vmatmul.mubr.f32.gmra.mrb[0].mxu0 %v57
    %v146 = vpop.f32.mrb[0].mxu0
    %v147 = vadd.f32 0.0, %v146
    %v148 = vpop.f32.mrb[0].mxu0
    %149 = vdwg.mxu0
    %v151 = vlaneseq
    %v152 = vshrl.u32 %v151, 7
    %v153 = vsub.s32 0, %v152
    %v154 = vrot.slane %v74, %v153
    %vm156 = vcmask 130048
    %v158 = vsel %vm156, %v54, 0
    %v161 = vsel %vm156, %v55, 0
    %163 = vmatprep.subr.mxu0 0.0
    %164 = vmatpush1.msra.mxu0 %v142
    %165 = vmatprep.subr.mxu0 0.0
    %166 = vmatpush1.msra.mxu0 %v147
    %167 = vmatprep.subr.mxu0 0.0
    %168 = vmatpush1.msra.mxu0 0.0
    %169 = vmatprep.subr.mxu0 0.0
    %170 = vmatpush1.msra.mxu0 0.0
    %171 = vmatprep.subr.mxu0 0.0
    %172 = vmatpush1.msra.mxu0 0.0
    %173 = vmatprep.subr.mxu0 0.0
    %174 = vmatpush1.msra.mxu0 0.0
    %175 = vmatprep.subr.mxu0 0.0
    %176 = vmatpush1.msra.mxu0 0.0
    %177 = vmatprep.subr.mxu0 0.0
    %178 = vmatpush1.msra.mxu0 0.0
    %179 = vmatprep.subr.mxu0 0.0
    %180 = vmatpush1.msra.mxu0 0.0
    %181 = vmatprep.subr.mxu0 0.0
    %182 = vmatpush1.msra.mxu0 0.0
    %183 = vmatprep.subr.mxu0 0.0
    %184 = vmatpush1.msra.mxu0 0.0
    %185 = vmatprep.subr.mxu0 0.0
    %186 = vmatpush1.msra.mxu0 0.0
    %187 = vmatprep.subr.mxu0 0.0
    %188 = vmatpush1.msra.mxu0 0.0
    %189 = vmatprep.subr.mxu0 0.0
    %190 = vmatpush1.msra.mxu0 0.0
    %191 = vmatprep.subr.mxu0 0.0
    %192 = vmatpush1.msra.mxu0 0.0
    %193 = vmatprep.subr.mxu0 0.0
    %194 = vmatpush1.msra.mxu0 0.0
    %195 = vmatprep.subr.mxu0 0.0
    %196 = vmatpush1.msra.mxu0 0.0
    %197 = vmatprep.subr.mxu0 0.0
    %198 = vmatpush1.msra.mxu0 0.0
    %199 = vmatprep.subr.mxu0 0.0
    %200 = vmatpush1.msra.mxu0 0.0
    %201 = vmatprep.subr.mxu0 0.0
    %202 = vmatpush1.msra.mxu0 0.0
    %203 = vmatprep.subr.mxu0 0.0
    %204 = vmatpush1.msra.mxu0 0.0
    %205 = vmatprep.subr.mxu0 0.0
    %206 = vmatpush1.msra.mxu0 0.0
    %207 = vmatprep.subr.mxu0 0.0
    %208 = vmatpush1.msra.mxu0 0.0
    %209 = vmatprep.subr.mxu0 0.0
    %210 = vmatpush1.msra.mxu0 0.0
    %211 = vmatprep.subr.mxu0 0.0
    %212 = vmatpush1.msra.mxu0 0.0
    %213 = vmatprep.subr.mxu0 0.0
    %214 = vmatpush1.msra.mxu0 0.0
    %215 = vmatprep.subr.mxu0 0.0
    %216 = vmatpush1.msra.mxu0 0.0
    %217 = vmatprep.subr.mxu0 0.0
    %218 = vmatpush1.msra.mxu0 0.0
    %219 = vmatprep.subr.mxu0 0.0
    %220 = vmatpush1.msra.mxu0 0.0
    %221 = vmatprep.subr.mxu0 0.0
    %222 = vmatpush1.msra.mxu0 0.0
    %223 = vmatprep.subr.mxu0 0.0
    %224 = vmatpush1.msra.mxu0 0.0
    %225 = vmatprep.subr.mxu0 0.0
    %226 = vmatpush1.msra.mxu0 0.0
    %227 = vmatprep.mubr.f32.mxu0 0.0
    %228 = vmatmul.mubr.f32.gmra.mrb[0].mxu0 %v158
    %v229 = vpop.f32.mrb[0].mxu0
    %v230 = vadd.f32 %v154, %v229
    %v231 = vpop.f32.mrb[0].mxu0
    %232 = vmatprep.mubr.f32.mxu0 0.0
    %233 = vmatmul.mubr.f32.gmra.mrb[0].mxu0 %v161
    %v234 = vpop.f32.mrb[0].mxu0
    %v235 = vadd.f32 %v154, %v234
    %v236 = vpop.f32.mrb[0].mxu0
    %237 = vdwg.mxu0
    %v238 = vmax.f32 %v230, 0.0
    %v239 = vmax.f32 %v235, 0.0
    %s240 = scalar_lea.vmem [#allocation2], 128
    %v241 = vld [vmem:[%s240] sm:$0xff]
    %v242 = vld [vmem:[%s240 + $0x8] sm:$0xff]
    %v243 = vld [vmem:[%s240 + $0x10] sm:$0xff]
    %v244 = vld [vmem:[%s240 + $0x18] sm:$0xff]
    %v245 = vld [vmem:[%s240 + $0x20] sm:$0xff]
    %v246 = vld [vmem:[%s240 + $0x28] sm:$0xff]
    %v247 = vld [vmem:[%s240 + $0x30] sm:$0xff]
    %v248 = vld [vmem:[%s240 + $0x38] sm:$0xff]
    %v249 = vld [vmem:[%s240 + $0x40] sm:$0xff]
    %v250 = vld [vmem:[%s240 + $0x48] sm:$0xff]
    %v251 = vld [vmem:[%s240 + $0x50] sm:$0xff]
    %v252 = vld [vmem:[%s240 + $0x58] sm:$0xff]
    %v253 = vld [vmem:[%s240 + $0x60] sm:$0xff]
    %v254 = vld [vmem:[%s240 + $0x68] sm:$0xff]
    %v255 = vld [vmem:[%s240 + $0x70] sm:$0xff]
    %v256 = vld [vmem:[%s240 + $0x78] sm:$0xff]
    %s257 = scalar_lea.vmem %s3, 1
    %v258 = vld [vmem:[%s257] sm:$0x1]
    %259 = vmatprep.subr.mxu0 0.0
    %260 = vmatpush1.msra.mxu0 %v241
    %261 = vmatprep.subr.mxu0 0.0
    %262 = vmatpush1.msra.mxu0 %v242
    %263 = vmatprep.subr.mxu0 0.0
    %264 = vmatpush1.msra.mxu0 %v243
    %265 = vmatprep.subr.mxu0 0.0
    %266 = vmatpush1.msra.mxu0 %v244
    %267 = vmatprep.subr.mxu0 0.0
    %268 = vmatpush1.msra.mxu0 %v245
    %269 = vmatprep.subr.mxu0 0.0
    %270 = vmatpush1.msra.mxu0 %v246
    %271 = vmatprep.subr.mxu0 0.0
    %272 = vmatpush1.msra.mxu0 %v247
    %273 = vmatprep.subr.mxu0 0.0
    %274 = vmatpush1.msra.mxu0 %v248
    %275 = vmatprep.subr.mxu0 0.0
    %276 = vmatpush1.msra.mxu0 %v249
    %277 = vmatprep.subr.mxu0 0.0
    %278 = vmatpush1.msra.mxu0 %v250
    %279 = vmatprep.subr.mxu0 0.0
    %280 = vmatpush1.msra.mxu0 %v251
    %281 = vmatprep.subr.mxu0 0.0
    %282 = vmatpush1.msra.mxu0 %v252
    %283 = vmatprep.subr.mxu0 0.0
    %284 = vmatpush1.msra.mxu0 %v253
    %285 = vmatprep.subr.mxu0 0.0
    %286 = vmatpush1.msra.mxu0 %v254
    %287 = vmatprep.subr.mxu0 0.0
    %288 = vmatpush1.msra.mxu0 %v255
    %289 = vmatprep.subr.mxu0 0.0
    %290 = vmatpush1.msra.mxu0 %v256
    %291 = vmatprep.subr.mxu0 0.0
    %292 = vmatpush1.msra.mxu0 0.0
    %293 = vmatprep.subr.mxu0 0.0
    %294 = vmatpush1.msra.mxu0 0.0
    %295 = vmatprep.subr.mxu0 0.0
    %296 = vmatpush1.msra.mxu0 0.0
    %297 = vmatprep.subr.mxu0 0.0
    %298 = vmatpush1.msra.mxu0 0.0
    %299 = vmatprep.subr.mxu0 0.0
    %300 = vmatpush1.msra.mxu0 0.0
    %301 = vmatprep.subr.mxu0 0.0
    %302 = vmatpush1.msra.mxu0 0.0
    %303 = vmatprep.subr.mxu0 0.0
    %304 = vmatpush1.msra.mxu0 0.0
    %305 = vmatprep.subr.mxu0 0.0
    %306 = vmatpush1.msra.mxu0 0.0
    %307 = vmatprep.subr.mxu0 0.0
    %308 = vmatpush1.msra.mxu0 0.0
    %309 = vmatprep.subr.mxu0 0.0
    %310 = vmatpush1.msra.mxu0 0.0
    %311 = vmatprep.subr.mxu0 0.0
    %312 = vmatpush1.msra.mxu0 0.0
    %313 = vmatprep.subr.mxu0 0.0
    %314 = vmatpush1.msra.mxu0 0.0
    %315 = vmatprep.subr.mxu0 0.0
    %316 = vmatpush1.msra.mxu0 0.0
    %317 = vmatprep.subr.mxu0 0.0
    %318 = vmatpush1.msra.mxu0 0.0
    %319 = vmatprep.subr.mxu0 0.0
    %320 = vmatpush1.msra.mxu0 0.0
    %321 = vmatprep.subr.mxu0 0.0
    %322 = vmatpush1.msra.mxu0 0.0
    %323 = vmatprep.mubr.f32.mxu0 0.0
    %324 = vmatmul.mubr.f32.gmra.mrb[0].mxu0 %v238
    %v325 = vpop.f32.mrb[0].mxu0
    %v326 = vadd.f32 0.0, %v325
    %v327 = vpop.f32.mrb[0].mxu0
    %328 = vmatprep.mubr.f32.mxu0 0.0
    %329 = vmatmul.mubr.f32.gmra.mrb[0].mxu0 %v239
    %v330 = vpop.f32.mrb[0].mxu0
    %v331 = vadd.f32 0.0, %v330
    %v332 = vpop.f32.mrb[0].mxu0
    %333 = vdwg.mxu0
    %v335 = vlaneseq
    %v336 = vshrl.u32 %v335, 7
    %v337 = vsub.s32 0, %v336
    %v338 = vrot.slane %v258, %v337
    %340 = vmatprep.subr.mxu0 0.0
    %341 = vmatpush1.msra.mxu0 %v326
    %342 = vmatprep.subr.mxu0 0.0
    %343 = vmatpush1.msra.mxu0 %v331
    %344 = vmatprep.subr.mxu0 0.0
    %345 = vmatpush1.msra.mxu0 0.0
    %346 = vmatprep.subr.mxu0 0.0
    %347 = vmatpush1.msra.mxu0 0.0
    %348 = vmatprep.subr.mxu0 0.0
    %349 = vmatpush1.msra.mxu0 0.0
    %350 = vmatprep.subr.mxu0 0.0
    %351 = vmatpush1.msra.mxu0 0.0
    %352 = vmatprep.subr.mxu0 0.0
    %353 = vmatpush1.msra.mxu0 0.0
    %354 = vmatprep.subr.mxu0 0.0
    %355 = vmatpush1.msra.mxu0 0.0
    %356 = vmatprep.subr.mxu0 0.0
    %357 = vmatpush1.msra.mxu0 0.0
    %358 = vmatprep.subr.mxu0 0.0
    %359 = vmatpush1.msra.mxu0 0.0
    %360 = vmatprep.subr.mxu0 0.0
    %361 = vmatpush1.msra.mxu0 0.0
    %362 = vmatprep.subr.mxu0 0.0
    %363 = vmatpush1.msra.mxu0 0.0
    %364 = vmatprep.subr.mxu0 0.0
    %365 = vmatpush1.msra.mxu0 0.0
    %366 = vmatprep.subr.mxu0 0.0
    %367 = vmatpush1.msra.mxu0 0.0
    %368 = vmatprep.subr.mxu0 0.0
    %369 = vmatpush1.msra.mxu0 0.0
    %370 = vmatprep.subr.mxu0 0.0
    %371 = vmatpush1.msra.mxu0 0.0
    %372 = vmatprep.subr.mxu0 0.0
    %373 = vmatpush1.msra.mxu0 0.0
    %374 = vmatprep.subr.mxu0 0.0
    %375 = vmatpush1.msra.mxu0 0.0
    %376 = vmatprep.subr.mxu0 0.0
    %377 = vmatpush1.msra.mxu0 0.0
    %378 = vmatprep.subr.mxu0 0.0
    %379 = vmatpush1.msra.mxu0 0.0
    %380 = vmatprep.subr.mxu0 0.0
    %381 = vmatpush1.msra.mxu0 0.0
    %382 = vmatprep.subr.mxu0 0.0
    %383 = vmatpush1.msra.mxu0 0.0
    %384 = vmatprep.subr.mxu0 0.0
    %385 = vmatpush1.msra.mxu0 0.0
    %386 = vmatprep.subr.mxu0 0.0
    %387 = vmatpush1.msra.mxu0 0.0
    %388 = vmatprep.subr.mxu0 0.0
    %389 = vmatpush1.msra.mxu0 0.0
    %390 = vmatprep.subr.mxu0 0.0
    %391 = vmatpush1.msra.mxu0 0.0
    %392 = vmatprep.subr.mxu0 0.0
    %393 = vmatpush1.msra.mxu0 0.0
    %394 = vmatprep.subr.mxu0 0.0
    %395 = vmatpush1.msra.mxu0 0.0
    %396 = vmatprep.subr.mxu0 0.0
    %397 = vmatpush1.msra.mxu0 0.0
    %398 = vmatprep.subr.mxu0 0.0
    %399 = vmatpush1.msra.mxu0 0.0
    %400 = vmatprep.subr.mxu0 0.0
    %401 = vmatpush1.msra.mxu0 0.0
    %402 = vmatprep.subr.mxu0 0.0
    %403 = vmatpush1.msra.mxu0 0.0
    %404 = vmatprep.mubr.f32.mxu0 0.0
    %405 = vmatmul.mubr.f32.gmra.mrb[0].mxu0 %v158
    %v406 = vpop.f32.mrb[0].mxu0
    %v407 = vadd.f32 %v338, %v406
    %v408 = vpop.f32.mrb[0].mxu0
    %409 = vmatprep.mubr.f32.mxu0 0.0
    %410 = vmatmul.mubr.f32.gmra.mrb[0].mxu0 %v161
    %v411 = vpop.f32.mrb[0].mxu0
    %v412 = vadd.f32 %v338, %v411
    %v413 = vpop.f32.mrb[0].mxu0
    %414 = vdwg.mxu0
    %v415 = vmax.f32 %v407, 0.0
    %v416 = vmax.f32 %v412, 0.0
    %v417 = vld [vmem:[%s4] sm:$0xff]
    %v419 = vsel %vm156, %v417, 0
    %421 = vmatprep.subr.mxu0 0.0
    %422 = vmatpush1.msra.mxu0 %v415
    %423 = vmatprep.subr.mxu0 0.0
    %424 = vmatpush1.msra.mxu0 %v416
    %425 = vmatprep.subr.mxu0 0.0
    %426 = vmatpush1.msra.mxu0 0.0
    %427 = vmatprep.subr.mxu0 0.0
    %428 = vmatpush1.msra.mxu0 0.0
    %429 = vmatprep.subr.mxu0 0.0
    %430 = vmatpush1.msra.mxu0 0.0
    %431 = vmatprep.subr.mxu0 0.0
    %432 = vmatpush1.msra.mxu0 0.0
    %433 = vmatprep.subr.mxu0 0.0
    %434 = vmatpush1.msra.mxu0 0.0
    %435 = vmatprep.subr.mxu0 0.0
    %436 = vmatpush1.msra.mxu0 0.0
    %437 = vmatprep.subr.mxu0 0.0
    %438 = vmatpush1.msra.mxu0 0.0
    %439 = vmatprep.subr.mxu0 0.0
    %440 = vmatpush1.msra.mxu0 0.0
    %441 = vmatprep.subr.mxu0 0.0
    %442 = vmatpush1.msra.mxu0 0.0
    %443 = vmatprep.subr.mxu0 0.0
    %444 = vmatpush1.msra.mxu0 0.0
    %445 = vmatprep.subr.mxu0 0.0
    %446 = vmatpush1.msra.mxu0 0.0
    %447 = vmatprep.subr.mxu0 0.0
    %448 = vmatpush1.msra.mxu0 0.0
    %449 = vmatprep.subr.mxu0 0.0
    %450 = vmatpush1.msra.mxu0 0.0
    %451 = vmatprep.subr.mxu0 0.0
    %452 = vmatpush1.msra.mxu0 0.0
    %453 = vmatprep.subr.mxu0 0.0
    %454 = vmatpush1.msra.mxu0 0.0
    %455 = vmatprep.subr.mxu0 0.0
    %456 = vmatpush1.msra.mxu0 0.0
    %457 = vmatprep.subr.mxu0 0.0
    %458 = vmatpush1.msra.mxu0 0.0
    %459 = vmatprep.subr.mxu0 0.0
    %460 = vmatpush1.msra.mxu0 0.0
    %461 = vmatprep.subr.mxu0 0.0
    %462 = vmatpush1.msra.mxu0 0.0
    %463 = vmatprep.subr.mxu0 0.0
    %464 = vmatpush1.msra.mxu0 0.0
    %465 = vmatprep.subr.mxu0 0.0
    %466 = vmatpush1.msra.mxu0 0.0
    %467 = vmatprep.subr.mxu0 0.0
    %468 = vmatpush1.msra.mxu0 0.0
    %469 = vmatprep.subr.mxu0 0.0
    %470 = vmatpush1.msra.mxu0 0.0
    %471 = vmatprep.subr.mxu0 0.0
    %472 = vmatpush1.msra.mxu0 0.0
    %473 = vmatprep.subr.mxu0 0.0
    %474 = vmatpush1.msra.mxu0 0.0
    %475 = vmatprep.subr.mxu0 0.0
    %476 = vmatpush1.msra.mxu0 0.0
    %477 = vmatprep.subr.mxu0 0.0
    %478 = vmatpush1.msra.mxu0 0.0
    %479 = vmatprep.subr.mxu0 0.0
    %480 = vmatpush1.msra.mxu0 0.0
    %481 = vmatprep.subr.mxu0 0.0
    %482 = vmatpush1.msra.mxu0 0.0
    %483 = vmatprep.subr.mxu0 0.0
    %484 = vmatpush1.msra.mxu0 0.0
    %485 = vmatprep.mubr.f32.mxu0 0.0
    %486 = vmatmul.mubr.f32.gmra.mrb[0].mxu0 %v419
    %v487 = vpop.f32.mrb[0].mxu0
    %v488 = vadd.f32 0.0, %v487
    %v489 = vpop.f32.mrb[0].mxu0
    %490 = vdwg.mxu0
    %v491 = vld [vmem:[#allocation4] sm:$0xff]
    %v492 = vld [vmem:[#allocation4 + $0x8] sm:$0xff]
    %v493 = vld [vmem:[#allocation4 + $0x10] sm:$0xff]
    %v494 = vld [vmem:[#allocation4 + $0x18] sm:$0xff]
    %v495 = vld [vmem:[#allocation4 + $0x20] sm:$0xff]
    %v496 = vld [vmem:[#allocation4 + $0x28] sm:$0xff]
    %v497 = vld [vmem:[#allocation4 + $0x30] sm:$0xff]
    %v498 = vld [vmem:[#allocation4 + $0x38] sm:$0xff]
    %v499 = vld [vmem:[#allocation4 + $0x40] sm:$0xff]
    %v500 = vld [vmem:[#allocation4 + $0x48] sm:$0xff]
    %v501 = vld [vmem:[#allocation4 + $0x50] sm:$0xff]
    %v502 = vld [vmem:[#allocation4 + $0x58] sm:$0xff]
    %v503 = vld [vmem:[#allocation4 + $0x60] sm:$0xff]
    %v504 = vld [vmem:[#allocation4 + $0x68] sm:$0xff]
    %v505 = vld [vmem:[#allocation4 + $0x70] sm:$0xff]
    %v506 = vld [vmem:[#allocation4 + $0x78] sm:$0xff]
    %v507 = vld [vmem:[%s6] sm:$0x1]
    %v509 = vlaneseq
    %v510 = vshrl.u32 %v509, 7
    %v511 = vsub.s32 0, %v510
    %v512 = vrot.slane %v507, %v511
    %514 = vmatprep.subr.mxu0 0.0
    %515 = vmatpush1.msra.mxu0 %v491
    %516 = vmatprep.subr.mxu0 0.0
    %517 = vmatpush1.msra.mxu0 %v492
    %518 = vmatprep.subr.mxu0 0.0
    %519 = vmatpush1.msra.mxu0 %v493
    %520 = vmatprep.subr.mxu0 0.0
    %521 = vmatpush1.msra.mxu0 %v494
    %522 = vmatprep.subr.mxu0 0.0
    %523 = vmatpush1.msra.mxu0 %v495
    %524 = vmatprep.subr.mxu0 0.0
    %525 = vmatpush1.msra.mxu0 %v496
    %526 = vmatprep.subr.mxu0 0.0
    %527 = vmatpush1.msra.mxu0 %v497
    %528 = vmatprep.subr.mxu0 0.0
    %529 = vmatpush1.msra.mxu0 %v498
    %530 = vmatprep.subr.mxu0 0.0
    %531 = vmatpush1.msra.mxu0 %v499
    %532 = vmatprep.subr.mxu0 0.0
    %533 = vmatpush1.msra.mxu0 %v500
    %534 = vmatprep.subr.mxu0 0.0
    %535 = vmatpush1.msra.mxu0 %v501
    %536 = vmatprep.subr.mxu0 0.0
    %537 = vmatpush1.msra.mxu0 %v502
    %538 = vmatprep.subr.mxu0 0.0
    %539 = vmatpush1.msra.mxu0 %v503
    %540 = vmatprep.subr.mxu0 0.0
    %541 = vmatpush1.msra.mxu0 %v504
    %542 = vmatprep.subr.mxu0 0.0
    %543 = vmatpush1.msra.mxu0 %v505
    %544 = vmatprep.subr.mxu0 0.0
    %545 = vmatpush1.msra.mxu0 %v506
    %546 = vmatprep.subr.mxu0 0.0
    %547 = vmatpush1.msra.mxu0 0.0
    %548 = vmatprep.subr.mxu0 0.0
    %549 = vmatpush1.msra.mxu0 0.0
    %550 = vmatprep.subr.mxu0 0.0
    %551 = vmatpush1.msra.mxu0 0.0
    %552 = vmatprep.subr.mxu0 0.0
    %553 = vmatpush1.msra.mxu0 0.0
    %554 = vmatprep.subr.mxu0 0.0
    %555 = vmatpush1.msra.mxu0 0.0
    %556 = vmatprep.subr.mxu0 0.0
    %557 = vmatpush1.msra.mxu0 0.0
    %558 = vmatprep.subr.mxu0 0.0
    %559 = vmatpush1.msra.mxu0 0.0
    %560 = vmatprep.subr.mxu0 0.0
    %561 = vmatpush1.msra.mxu0 0.0
    %562 = vmatprep.subr.mxu0 0.0
    %563 = vmatpush1.msra.mxu0 0.0
    %564 = vmatprep.subr.mxu0 0.0
    %565 = vmatpush1.msra.mxu0 0.0
    %566 = vmatprep.subr.mxu0 0.0
    %567 = vmatpush1.msra.mxu0 0.0
    %568 = vmatprep.subr.mxu0 0.0
    %569 = vmatpush1.msra.mxu0 0.0
    %570 = vmatprep.subr.mxu0 0.0
    %571 = vmatpush1.msra.mxu0 0.0
    %572 = vmatprep.subr.mxu0 0.0
    %573 = vmatpush1.msra.mxu0 0.0
    %574 = vmatprep.subr.mxu0 0.0
    %575 = vmatpush1.msra.mxu0 0.0
    %576 = vmatprep.subr.mxu0 0.0
    %577 = vmatpush1.msra.mxu0 0.0
    %578 = vmatprep.mubr.f32.mxu0 0.0
    %579 = vmatmul.mubr.f32.gmra.mrb[0].mxu0 %v488
    %v580 = vpop.f32.mrb[0].mxu0
    %v581 = vadd.f32 %v512, %v580
    %v582 = vpop.f32.mrb[0].mxu0
    %583 = vdwg.mxu0
    %584 = vst [vmem:[%s7] sm:$0xff] %v581
    // Predicated region
    $region38: #{forward.1} parent=1 // pred_check
      _
    $region39: #{forward.1} parent=1 // pred_check_branch
      %586 = sbr.rel (0) target = $region41
    $region40: #{forward.1} parent=1 // pred_region
      _
    $region41: #{forward.1} parent=1 // pred_fallthru
      _
    // Predicated region
    $region42: #{forward.1} parent=1 // pred_check
      _
    $region43: #{forward.1} parent=1 // pred_check_branch
      %588 = sbr.rel (0) target = $region45
    $region44: #{forward.1} parent=1 // pred_region
      _
    $region45: #{forward.1} parent=1 // pred_fallthru
      _
    %589 = vsyncpa [#allocation3], 1
    %590 = vsyncpa [#allocation5], 1

</llo_original>
